<compile_context>
chip_gen: v6e
topology: v6e:2x2x1
jax: 0.10.0
libtpu: 0.0.40
codegen_flags: <defaults>
</compile_context>

<pallas_src>
import jax
import jax.numpy as jnp
from jax import lax
from jax.experimental import pallas as pl
from jax.experimental.pallas import tpu as pltpu

LANES = 128
CHUNK_ROWS = 512          # inner compute chunk (multiple of 8/16/32 sublane grans)
PAD_LOGIT = -1e4          # only used conceptually; no full-array padding anymore
_X_SAT = 17.32868         # f32 sigmoid(x) rounds to exactly 1.0 above ~25*ln2


def _sublane_gran(dtype):
    return {4: 8, 2: 16, 1: 32}.get(jnp.dtype(dtype).itemsize, 8)


def _tpu_config():
    """(ncores, vmem_limit_bytes, block_rows_max) per TPU generation."""
    kind = ""
    try:
        kind = jax.devices()[0].device_kind.lower()
    except Exception:
        pass
    is_v7x = ("v7" in kind) or ("7x" in kind)
    if is_v7x:
        ncores, vmem_limit, br_max = 2, 32 * 1024 * 1024, 2048
    else:
        ncores, vmem_limit, br_max = 1, 64 * 1024 * 1024, 4096
    # Clamp against actual VMEM capacity if the runtime exposes it.
    try:
        cap = int(getattr(pltpu.get_tpu_info(), "vmem_capacity_bytes"))
        if cap and cap < 2 * vmem_limit:
            vmem_limit = max(16 * 1024 * 1024, cap // 2)
            br_max = min(br_max, 2048)
    except Exception:
        pass
    return ncores, vmem_limit, br_max


def _recip_kernel(d):
    """~1/d on the EUP vrcp slot + one Newton refinement (f32 accuracy)."""
    r = pl.reciprocal(d, approx=True)
    return r * (2.0 - d * r)


def _elem_terms(x, t, recip):
    """Per-element [p*t, p+t, bce] with PyTorch BCE clamp semantics.

    p = sigmoid(x) built from e = exp(-|x|) and a reciprocal (2 EUP transcend.
    per element: exp + log1p).  BCE log terms are the exact log-sigmoid forms
    with PyTorch's -100 clamp and its f32 sigmoid-saturation-to-1.0 emulated by
    x-threshold selects.
    """
    neg_abs = -jnp.abs(x)
    e = jnp.exp(neg_abs)                      # EUP
    sp = jnp.log1p(e)                         # EUP: softplus(-|x|)
    mx = jnp.maximum(x, 0.0)
    r = recip(1.0 + e)                        # ~1 / (1 + e)
    p = jnp.where(x >= 0.0, r, e * r)         # sigmoid(x)
    log_p = jnp.where(x < -100.0, jnp.float32(-100.0), (x - mx) - sp)
    log_1mp = jnp.where(x > _X_SAT, jnp.float32(-100.0), -(mx + sp))
    bce = -(log_1mp + t * (log_p - log_1mp))
    return p * t, p + t, bce


def _partial_sums_ref(x, t):
    """Fused plain-JAX [intersection, total, bce_sum] partials (ragged tail /
    tiny-input fast path).  Same math as the kernel, exact reciprocal."""
    pt, tot, bce = _elem_terms(x.astype(jnp.float32), t.astype(jnp.float32),
                               lambda d: 1.0 / d)
    return jnp.stack([jnp.sum(pt), jnp.sum(tot), jnp.sum(bce)])


def _make_kernel(chunk_rows, n_chunks):
    """Kernel over one (block_rows, 128) tile; block_rows = chunk_rows * n_chunks."""

    def kernel(x_ref, t_ref, acc_ref):
        @pl.when(pl.program_id(1) == 0)
        def _():
            acc_ref[...] = jnp.zeros_like(acc_ref)

        def fold(v):
            # (chunk_rows, 128) -> (8, 128) partial sums (VPU adds only).
            return jnp.sum(v.reshape(-1, 8, LANES), axis=0)

        def accumulate(xc, tc):
            pt, tot, bce = _elem_terms(xc.astype(jnp.float32),
                                       tc.astype(jnp.float32), _recip_kernel)
            acc_ref[0] += fold(pt)    # intersection partials
            acc_ref[1] += fold(tot)   # total partials
            acc_ref[2] += fold(bce)   # BCE-sum partials

        if n_chunks == 1:
            accumulate(x_ref[...], t_ref[...])
        else:
            # Inner chunk loop: keeps elementwise temporaries chunk-sized while
            # the DMA tile (the whole block) stays large.
            def body(c, carry):
                start = pl.multiple_of(c * chunk_rows, chunk_rows)
                accumulate(x_ref[pl.ds(start, chunk_rows), :],
                           t_ref[pl.ds(start, chunk_rows), :])
                return carry
            lax.fori_loop(0, n_chunks, body, 0)

    return kernel


def iou_loss(inputs, targets, smooth=1.0, *, block_rows=None):
    """Pallas implementation of IoULoss.forward (returns a scalar f32)."""
    if inputs.shape != targets.shape:
        targets = targets.reshape(inputs.shape)
    n = int(inputs.size)
    x = inputs.reshape(-1)            # native dtype; cast happens in-kernel
    t = targets.reshape(-1)

    ncores, vmem_limit, br_max = _tpu_config()
    gran = max(_sublane_gran(x.dtype), _sublane_gran(t.dtype))

    rows = n // LANES                           # whole 128-lane rows
    rows_per_core = rows // ncores
    if block_rows is None:
        block_rows = br_max if rows_per_core >= br_max else gran * (rows_per_core // gran)
    else:
        block_rows = min(br_max, max(gran, gran * (int(block_rows) // gran)))
    bpc = rows_per_core // block_rows if block_rows > 0 else 0
    rows_main = ncores * bpc * block_rows       # rows handled by the kernel
    n_main = rows_main * LANES

    sums = jnp.zeros((3,), jnp.float32)

    if bpc > 0:
        if n % LANES == 0:
            x2 = x.reshape(rows, LANES)         # free bitcast, no extra HBM traffic
            t2 = t.reshape(rows, LANES)
        else:
            # Unaligned element count: XLA materializes this bounded slice
            # (rows*128 elems).  Aligned inputs (the common case) skip it.
            x2 = x[: rows * LANES].reshape(rows, LANES)
            t2 = t[: rows * LANES].reshape(rows, LANES)

        chunk_rows = CHUNK_ROWS if block_rows % CHUNK_ROWS == 0 else block_rows
        n_chunks = block_rows // chunk_rows
        itemsz = jnp.dtype(x.dtype).itemsize + jnp.dtype(t.dtype).itemsize

        acc = pl.pallas_call(
            _make_kernel(chunk_rows, n_chunks),
            out_shape=jax.ShapeDtypeStruct((ncores, 3, 8, LANES), jnp.float32),
            grid=(ncores, bpc),
            in_specs=[
                pl.BlockSpec((block_rows, LANES), lambda c, i: (c * bpc + i, 0)),
                pl.BlockSpec((block_rows, LANES), lambda c, i: (c * bpc + i, 0)),
            ],
            out_specs=pl.BlockSpec((None, 3, 8, LANES), lambda c, i: (c, 0, 0, 0)),
            compiler_params=pltpu.CompilerParams(
                dimension_semantics=("parallel", "arbitrary"),
                vmem_limit_bytes=vmem_limit,
            ),
            cost_estimate=pl.CostEstimate(
                flops=18 * n_main,
                transcendentals=3 * n_main,
                bytes_accessed=n_main * itemsz + ncores * 3 * 8 * LANES * 4,
            ),
        )(x2, t2)
        sums = sums + jnp.sum(acc, axis=(0, 2, 3))

    if n_main < n:
        # Ragged remainder (< ncores*block_rows*128 + 128 elems): a fused
        # plain-JAX reduction that reads only the tail from HBM — no full-array
        # padding/copies.
        sums = sums + _partial_sums_ref(x[n_main:], t[n_main:])

    intersection, total, bce_sum = sums[0], sums[1], sums[2]
    union = total - intersection
    iou = 1.0 - (intersection + smooth) / (union + smooth)
    bce = bce_sum / n
    return iou + bce


def iou_loss_ref(inputs, targets, smooth=1.0):
    """Pure-JAX reference matching PyTorch semantics (BCE log clamp at -100)."""
    p = jax.nn.sigmoid(inputs.astype(jnp.float32)).reshape(-1)
    t = targets.astype(jnp.float32).reshape(-1)
    intersection = jnp.sum(p * t)
    total = jnp.sum(p + t)
    union = total - intersection
    iou = 1.0 - (intersection + smooth) / (union + smooth)
    bce = jnp.mean(
        -(t * jnp.maximum(jnp.log(p), -100.0)
          + (1.0 - t) * jnp.maximum(jnp.log1p(-p), -100.0))
    )
    return iou + bce


if __name__ == "__main__":
    key = jax.random.PRNGKey(0)
    k = jax.random.split(key, 8)

    # 1) Typical aligned NCHW logits and {0,1} targets (zero-copy main path).
    x = jax.random.normal(k[0], (2, 4, 16, 16), dtype=jnp.float32)
    t = (jax.random.uniform(k[1], (2, 4, 16, 16)) > 0.5).astype(jnp.float32)
    out = jax.block_until_ready(iou_loss(x, t))
    ref = iou_loss_ref(x, t)
    assert jnp.allclose(out, ref, rtol=1e-5, atol=1e-5), (out, ref)

    # 2) Unaligned element count -> bounded slice + fused plain-JAX tail.
    x2 = jax.random.normal(k[2], (2, 3, 17, 19), dtype=jnp.float32) * 3.0
    t2 = (jax.random.uniform(k[3], (2, 3, 17, 19)) > 0.5).astype(jnp.float32)
    out2 = jax.block_until_ready(iou_loss(x2, t2))
    ref2 = iou_loss_ref(x2, t2)
    assert jnp.allclose(out2, ref2, rtol=1e-5, atol=1e-5), (out2, ref2)

    # 3) Several blocks per core -> grid accumulation path.
    x3 = jax.random.normal(k[4], (2, 4, 32, 32), dtype=jnp.float32)
    t3 = (jax.random.uniform(k[5], (2, 4, 32, 32)) > 0.5).astype(jnp.float32)
    out3 = jax.block_until_ready(iou_loss(x3, t3, block_rows=8))
    ref3 = iou_loss_ref(x3, t3)
    assert jnp.allclose(out3, ref3, rtol=1e-5, atol=1e-5), (out3, ref3)

    # 4) Larger aligned input with bf16 logits and a 1024-row block -> exercises
    #    the inner chunked fori_loop (512-row compute chunks in one DMA tile).
    x4 = jax.random.normal(k[6], (2, 2, 256, 256), dtype=jnp.float32).astype(jnp.bfloat16)
    t4 = (jax.random.uniform(k[7], (2, 2, 256, 256)) > 0.5).astype(jnp.float32)
    out4 = jax.block_until_ready(iou_loss(x4, t4, block_rows=1024))
    ref4 = iou_loss_ref(x4, t4)
    assert jnp.allclose(out4, ref4, rtol=1e-5, atol=1e-5), (out4, ref4)

    print("KERNEL_OK")
</pallas_src>

<mosaic_0001>
module attributes {stable_mosaic.version = 11 : i64} {
  func.func @kernel(%arg0: i32, %arg1: i32, %arg2: memref<16x128xf32, #tpu.memory_space<vmem>>, %arg3: memref<16x128xf32, #tpu.memory_space<vmem>>, %arg4: memref<1x3x8x128xf32, #tpu.memory_space<vmem>>) attributes {dimension_semantics = [#tpu.dimension_semantics<parallel>, #tpu.dimension_semantics<arbitrary>], iteration_bounds = array<i64: 1, 1>, scalar_prefetch = 0 : i64, scratch_operands = 0 : i64, tpu.core_type = #tpu.core_type<tc>, window_params = [{transform_indices = @transform_0, window_bounds = array<i64: 16, 128>}, {transform_indices = @transform_1, window_bounds = array<i64: 16, 128>}, {transform_indices = @transform_2, window_bounds = array<i64: 1, 3, 8, 128>}]} {
    %c0_i32 = arith.constant 0 : i32
    %0 = arith.cmpi eq, %arg1, %c0_i32 : i32
    %1 = arith.extui %0 : i1 to i32
    %c0_i32_0 = arith.constant 0 : i32
    %2 = arith.cmpi ne, %1, %c0_i32_0 : i32
    scf.if %2 {
      %cst_39 = arith.constant 0.000000e+00 : f32
      %67 = vector.broadcast %cst_39 : f32 to vector<3x8x128xf32>
      %c0_40 = arith.constant 0 : index
      %c0_41 = arith.constant 0 : index
      %c0_42 = arith.constant 0 : index
      %c0_43 = arith.constant 0 : index
      %68 = vector.load %arg4[%c0_40, %c0_41, %c0_42, %c0_43] : memref<1x3x8x128xf32, #tpu.memory_space<vmem>>, vector<1x3x8x128xf32>
      %69 = vector.shape_cast %68 : vector<1x3x8x128xf32> to vector<3x8x128xf32>
      %70 = vector.shape_cast %67 : vector<3x8x128xf32> to vector<1x3x8x128xf32>
      tpu.vector_store %arg4[%c0_40, %c0_41, %c0_42, %c0_43], %70 {strides = array<i32>} : memref<1x3x8x128xf32, #tpu.memory_space<vmem>>, vector<1x3x8x128xf32>,
    } else {
    }
    %c0 = arith.constant 0 : index
    %c0_1 = arith.constant 0 : index
    %3 = vector.load %arg2[%c0, %c0_1] : memref<16x128xf32, #tpu.memory_space<vmem>>, vector<16x128xf32>
    %c0_2 = arith.constant 0 : index
    %c0_3 = arith.constant 0 : index
    %4 = vector.load %arg3[%c0_2, %c0_3] : memref<16x128xf32, #tpu.memory_space<vmem>>, vector<16x128xf32>
    %5 = math.absf %3 : vector<16x128xf32>
    %cst = arith.constant 0.000000e+00 : f32
    %6 = vector.broadcast %cst : f32 to vector<16x128xf32>
    %7 = arith.subf %6, %5 : vector<16x128xf32>
    %8 = math.exp %7 : vector<16x128xf32>
    %9 = math.log1p %8 : vector<16x128xf32>
    %cst_4 = arith.constant 0.000000e+00 : f32
    %10 = vector.broadcast %cst_4 : f32 to vector<16x128xf32>
    %11 = arith.maximumf %3, %10 : vector<16x128xf32>
    %cst_5 = arith.constant 1.000000e+00 : f32
    %12 = vector.broadcast %cst_5 : f32 to vector<16x128xf32>
    %13 = arith.addf %12, %8 : vector<16x128xf32>
    %14 = tpu.reciprocal %13 {approx = true} : vector<16x128xf32> -> vector<16x128xf32>
    %15 = arith.mulf %13, %14 : vector<16x128xf32>
    %cst_6 = arith.constant 2.000000e+00 : f32
    %16 = vector.broadcast %cst_6 : f32 to vector<16x128xf32>
    %17 = arith.subf %16, %15 : vector<16x128xf32>
    %18 = arith.mulf %14, %17 : vector<16x128xf32>
    %cst_7 = arith.constant 0.000000e+00 : f32
    %19 = vector.broadcast %cst_7 : f32 to vector<16x128xf32>
    %20 = arith.cmpf oge, %3, %19 : vector<16x128xf32>
    %21 = arith.mulf %8, %18 : vector<16x128xf32>
    %22 = arith.select %20, %18, %21 : vector<16x128xi1>, vector<16x128xf32>
    %cst_8 = arith.constant -1.000000e+02 : f32
    %23 = vector.broadcast %cst_8 : f32 to vector<16x128xf32>
    %24 = arith.cmpf olt, %3, %23 : vector<16x128xf32>
    %25 = arith.subf %3, %11 : vector<16x128xf32>
    %26 = arith.subf %25, %9 : vector<16x128xf32>
    %cst_9 = arith.constant -1.000000e+02 : f32
    %27 = vector.broadcast %cst_9 : f32 to vector<16x128xf32>
    %28 = arith.select %24, %27, %26 : vector<16x128xi1>, vector<16x128xf32>
    %cst_10 = arith.constant 17.32868 : f32
    %29 = vector.broadcast %cst_10 : f32 to vector<16x128xf32>
    %30 = arith.cmpf ogt, %3, %29 : vector<16x128xf32>
    %31 = arith.addf %11, %9 : vector<16x128xf32>
    %cst_11 = arith.constant 0.000000e+00 : f32
    %32 = vector.broadcast %cst_11 : f32 to vector<16x128xf32>
    %33 = arith.subf %32, %31 : vector<16x128xf32>
    %cst_12 = arith.constant -1.000000e+02 : f32
    %34 = vector.broadcast %cst_12 : f32 to vector<16x128xf32>
    %35 = arith.select %30, %34, %33 : vector<16x128xi1>, vector<16x128xf32>
    %36 = arith.subf %28, %35 : vector<16x128xf32>
    %37 = arith.mulf %4, %36 : vector<16x128xf32>
    %38 = arith.addf %35, %37 : vector<16x128xf32>
    %cst_13 = arith.constant 0.000000e+00 : f32
    %39 = vector.broadcast %cst_13 : f32 to vector<16x128xf32>
    %40 = arith.subf %39, %38 : vector<16x128xf32>
    %41 = arith.mulf %22, %4 : vector<16x128xf32>
    %42 = arith.addf %22, %4 : vector<16x128xf32>
    %c0_14 = arith.constant 0 : index
    %c0_15 = arith.constant 0 : index
    %c0_16 = arith.constant 0 : index
    %c0_17 = arith.constant 0 : index
    %43 = vector.load %arg4[%c0_14, %c0_15, %c0_16, %c0_17] : memref<1x3x8x128xf32, #tpu.memory_space<vmem>>, vector<1x1x8x128xf32>
    %44 = vector.shape_cast %43 : vector<1x1x8x128xf32> to vector<8x128xf32>
    %45 = vector.shape_cast %41 : vector<16x128xf32> to vector<2x8x128xf32>
    %cst_18 = arith.constant dense<0.000000e+00> : vector<8x128xf32>
    %46 = vector.multi_reduction <add>, %45, %cst_18 [0] : vector<2x8x128xf32> to vector<8x128xf32>
    %47 = arith.addf %44, %46 : vector<8x128xf32>
    %c0_19 = arith.constant 0 : index
    %c0_20 = arith.constant 0 : index
    %c0_21 = arith.constant 0 : index
    %c0_22 = arith.constant 0 : index
    %48 = vector.load %arg4[%c0_19, %c0_20, %c0_21, %c0_22] : memref<1x3x8x128xf32, #tpu.memory_space<vmem>>, vector<1x1x8x128xf32>
    %49 = vector.shape_cast %48 : vector<1x1x8x128xf32> to vector<8x128xf32>
    %50 = vector.shape_cast %47 : vector<8x128xf32> to vector<1x1x8x128xf32>
    tpu.vector_store %arg4[%c0_19, %c0_20, %c0_21, %c0_22], %50 {strides = array<i32>} : memref<1x3x8x128xf32, #tpu.memory_space<vmem>>, vector<1x1x8x128xf32>,
    %c0_23 = arith.constant 0 : index
    %c1 = arith.constant 1 : index
    %c0_24 = arith.constant 0 : index
    %c0_25 = arith.constant 0 : index
    %51 = vector.load %arg4[%c0_23, %c1, %c0_24, %c0_25] : memref<1x3x8x128xf32, #tpu.memory_space<vmem>>, vector<1x1x8x128xf32>
    %52 = vector.shape_cast %51 : vector<1x1x8x128xf32> to vector<8x128xf32>
    %53 = vector.shape_cast %42 : vector<16x128xf32> to vector<2x8x128xf32>
    %cst_26 = arith.constant dense<0.000000e+00> : vector<8x128xf32>
    %54 = vector.multi_reduction <add>, %53, %cst_26 [0] : vector<2x8x128xf32> to vector<8x128xf32>
    %55 = arith.addf %52, %54 : vector<8x128xf32>
    %c0_27 = arith.constant 0 : index
    %c1_28 = arith.constant 1 : index
    %c0_29 = arith.constant 0 : index
    %c0_30 = arith.constant 0 : index
    %56 = vector.load %arg4[%c0_27, %c1_28, %c0_29, %c0_30] : memref<1x3x8x128xf32, #tpu.memory_space<vmem>>, vector<1x1x8x128xf32>
    %57 = vector.shape_cast %56 : vector<1x1x8x128xf32> to vector<8x128xf32>
    %58 = vector.shape_cast %55 : vector<8x128xf32> to vector<1x1x8x128xf32>
    tpu.vector_store %arg4[%c0_27, %c1_28, %c0_29, %c0_30], %58 {strides = array<i32>} : memref<1x3x8x128xf32, #tpu.memory_space<vmem>>, vector<1x1x8x128xf32>,
    %c0_31 = arith.constant 0 : index
    %c2 = arith.constant 2 : index
    %c0_32 = arith.constant 0 : index
    %c0_33 = arith.constant 0 : index
    %59 = vector.load %arg4[%c0_31, %c2, %c0_32, %c0_33] : memref<1x3x8x128xf32, #tpu.memory_space<vmem>>, vector<1x1x8x128xf32>
    %60 = vector.shape_cast %59 : vector<1x1x8x128xf32> to vector<8x128xf32>
    %61 = vector.shape_cast %40 : vector<16x128xf32> to vector<2x8x128xf32>
    %cst_34 = arith.constant dense<0.000000e+00> : vector<8x128xf32>
    %62 = vector.multi_reduction <add>, %61, %cst_34 [0] : vector<2x8x128xf32> to vector<8x128xf32>
    %63 = arith.addf %60, %62 : vector<8x128xf32>
    %c0_35 = arith.constant 0 : index
    %c2_36 = arith.constant 2 : index
    %c0_37 = arith.constant 0 : index
    %c0_38 = arith.constant 0 : index
    %64 = vector.load %arg4[%c0_35, %c2_36, %c0_37, %c0_38] : memref<1x3x8x128xf32, #tpu.memory_space<vmem>>, vector<1x1x8x128xf32>
    %65 = vector.shape_cast %64 : vector<1x1x8x128xf32> to vector<8x128xf32>
    %66 = vector.shape_cast %63 : vector<8x128xf32> to vector<1x1x8x128xf32>
    tpu.vector_store %arg4[%c0_35, %c2_36, %c0_37, %c0_38], %66 {strides = array<i32>} : memref<1x3x8x128xf32, #tpu.memory_space<vmem>>, vector<1x1x8x128xf32>,
    return
  }
  func.func @transform_0(%arg0: i32, %arg1: i32) -> (i32, i32) {
    %c1_i32 = arith.constant 1 : i32
    %0 = arith.muli %arg0, %c1_i32 : i32
    %1 = arith.addi %0, %arg1 : i32
    %c0_i32 = arith.constant 0 : i32
    %c0_i32_0 = arith.constant 0 : i32
    return %1, %c0_i32 : i32, i32
  }
  func.func @transform_1(%arg0: i32, %arg1: i32) -> (i32, i32) {
    %c1_i32 = arith.constant 1 : i32
    %0 = arith.muli %arg0, %c1_i32 : i32
    %1 = arith.addi %0, %arg1 : i32
    %c0_i32 = arith.constant 0 : i32
    %c0_i32_0 = arith.constant 0 : i32
    return %1, %c0_i32 : i32, i32
  }
  func.func @transform_2(%arg0: i32, %arg1: i32) -> (i32, i32, i32, i32) {
    %c0_i32 = arith.constant 0 : i32
    %c0_i32_0 = arith.constant 0 : i32
    %c0_i32_1 = arith.constant 0 : i32
    %c0_i32_2 = arith.constant 0 : i32
    return %arg0, %c0_i32, %c0_i32_0, %c0_i32_1 : i32, i32, i32, i32
  }
}

</mosaic_0001>

<llo_original>
// kernel: tpu_custom_call.1
$region0: #{tpu_custom_call.1}
  #allocation0 [shape = 'u32[]', space=smem, size = 0x4, offset = 0x4, fixed_abs, tag = 'smem constant byte address 0x4 - core index']
  #allocation1 [shape = 'u32[144,128]{1,0:T(1,128)}', space=vmem, size = 0x12000, scoped, tag = 'internal scratch']
  %s0 = inlined_call_operand.hbm [shape: f32[16,128], index: 0, kind: input, shape index: {}]
  %s1 = inlined_call_operand.hbm [shape: f32[16,128], index: 1, kind: input, shape index: {}]
  %s2 = inlined_call_operand.hbm [shape: f32[1,3,8,128], index: 2, kind: output, shape index: {}]
  %s3 = sld [smem:[#allocation0]]
  $region30: #{tpu_custom_call.1} parent=0
    _
  %s5 = ssub.s32 1, %s3
  %s6 = scalar_select 0, %s5, %s3
  $region1: #{tpu_custom_call.1} parent=0
    #allocation2 [shape = 'u8[8192]{0}', space=vmem, size = 0x2000, scoped, tag = 'input window, operand 0, single buffered']
    #allocation3 [shape = 's32[1]{0}', space=sflag, size = 0x4, scoped, tag = 'scoped memory for tpu_custom_call.1']
    #allocation4 [shape = 's32[1]{0}', space=sflag, size = 0x4, scoped, tag = 'scoped memory for tpu_custom_call.1']
    #allocation5 [shape = 'u8[8192]{0}', space=vmem, size = 0x2000, scoped, tag = 'input window, operand 1, single buffered']
    #allocation6 [shape = 's32[1]{0}', space=sflag, size = 0x4, scoped, tag = 'scoped memory for tpu_custom_call.1']
    #allocation7 [shape = 'u8[12288]{0}', space=vmem, size = 0x3000, scoped, tag = 'output window, operand 0, single buffered']
    %7 = vsyncpa [#allocation3], 0
    %8 = vsyncpa [#allocation6], 0
    %9 = vsyncpa [#allocation4], 0
    // Predicated region
    $region2: #{tpu_custom_call.1} parent=1 // pred_check
      _
    $region3: #{tpu_custom_call.1} parent=1 // pred_check_branch
      %11 = sbr.rel (0) target = $region5
    $region4: #{tpu_custom_call.1} parent=1 // pred_region
      %s12 = sadd.s32 0, 0
      %s13 = smul.u32 2, %s12
      %s15 = ssub.s32 256, 256
      %16 = vsyncadd [#allocation3], %s15
      %s17 = smul.addr %s13, 128
      %s18 = scalar_lea.hbm %s0, %s17
      %s19 = sshll.u32 [#allocation2], 4
      %s20 = int_to_ptr.vmem [resolvable:$true] %s19
      %25 = dma.hbm_to_vmem [thread:$0]  %s18, 256, %s20, [#allocation3], 128, 128, 8
    $region5: #{tpu_custom_call.1} parent=1 // pred_fallthru
      _
    // Predicated region
    $region6: #{tpu_custom_call.1} parent=1 // pred_check
      _
    $region7: #{tpu_custom_call.1} parent=1 // pred_check_branch
      %27 = sbr.rel (0) target = $region9
    $region8: #{tpu_custom_call.1} parent=1 // pred_region
      %s28 = sadd.s32 0, 0
      %s29 = smul.u32 2, %s28
      %s31 = ssub.s32 256, 256
      %32 = vsyncadd [#allocation6], %s31
      %s33 = smul.addr %s29, 128
      %s34 = scalar_lea.hbm %s1, %s33
      %s35 = sshll.u32 [#allocation5], 4
      %s36 = int_to_ptr.vmem [resolvable:$true] %s35
      %41 = dma.hbm_to_vmem [thread:$0]  %s34, 256, %s36, [#allocation6], 128, 128, 8
    $region9: #{tpu_custom_call.1} parent=1 // pred_fallthru
      _
    // Predicated region
    $region10: #{tpu_custom_call.1} parent=1 // pred_check
      _
    $region11: #{tpu_custom_call.1} parent=1 // pred_check_branch
      %43 = sbr.rel (0) target = $region13
    $region12: #{tpu_custom_call.1} parent=1 // pred_region
      %44 = dma.done [#allocation3], 256
    $region13: #{tpu_custom_call.1} parent=1 // pred_fallthru
      _
    // Predicated region
    $region14: #{tpu_custom_call.1} parent=1 // pred_check
      _
    $region15: #{tpu_custom_call.1} parent=1 // pred_check_branch
      %46 = sbr.rel (0) target = $region17
    $region16: #{tpu_custom_call.1} parent=1 // pred_region
      %47 = dma.done [#allocation6], 256
    $region17: #{tpu_custom_call.1} parent=1 // pred_fallthru
      _
    %s48 = sadd.s32 0, 0
    %s49 = smul.u32 2, %s48
    %s50 = sadd.s32 0, 0
    %s51 = smul.u32 2, %s50
    %p52 = scmp.eq.s32.totalorder 0, 0
    // Predicated region
    $region18: #{tpu_custom_call.1} parent=1 // pred_check
      %p53 = pneg %p52
    $region19: #{tpu_custom_call.1} parent=1 // pred_check_branch
      %55 = sbr.rel (%p53) target = $region21
    $region20: #{tpu_custom_call.1} parent=1 // pred_region
      %56 = vst [vmem:[#allocation7] sm:$0xff] 0.0
      %57 = vst [vmem:[#allocation7 + $0x8] sm:$0xff] 0.0
      %58 = vst [vmem:[#allocation7 + $0x10] sm:$0xff] 0.0
    $region21: #{tpu_custom_call.1} parent=1 // pred_fallthru
      _
    %v59 = vld [vmem:[#allocation2] sm:$0xff]
    %v60 = vld [vmem:[#allocation2 + $0x8] sm:$0xff]
    %v61 = vld [vmem:[#allocation5] sm:$0xff]
    %v62 = vld [vmem:[#allocation5 + $0x8] sm:$0xff]
    %v63 = vand.u32 2147483647, %v59
    %v64 = vand.u32 2147483647, %v60
    %v65 = vsub.f32 0.0, %v63
    %v66 = vsub.f32 0.0, %v64
    %v67 = vmul.f32 %v65, 1.442695
    %v68 = vpow.pop %v67
    %v69 = vmul.f32 %v66, 1.442695
    %v70 = vpow.pop %v69
    %v71 = vadd.f32 %v68, 1.0
    %v72 = vlog2.pop %v71
    %v73 = vmul.f32 %v72, 0.6931472
    %v74 = vmul.f32 -0.5, %v68
    %v75 = vadd.f32 %v74, 1.0
    %v76 = vmul.f32 %v75, %v68
    %v77 = vand.u32 2147483647, %v68
    %vm78 = vcmp.lt.f32.partialorder %v77, 0.0004427343
    %v79 = vsel %vm78, %v76, %v73
    %v80 = vadd.f32 %v70, 1.0
    %v81 = vlog2.pop %v80
    %v82 = vmul.f32 %v81, 0.6931472
    %v83 = vmul.f32 -0.5, %v70
    %v84 = vadd.f32 %v83, 1.0
    %v85 = vmul.f32 %v84, %v70
    %v86 = vand.u32 2147483647, %v70
    %vm87 = vcmp.lt.f32.partialorder %v86, 0.0004427343
    %v88 = vsel %vm87, %v85, %v82
    %v89 = vmax.f32 %v59, 0.0
    %v90 = vmax.f32 %v60, 0.0
    %v91 = vadd.f32 %v68, 1.0
    %v92 = vadd.f32 %v70, 1.0
    %v93 = vrcp.pop %v91
    %v94 = vrcp.pop %v92
    %v95 = vmul.f32 %v91, %v93
    %v96 = vmul.f32 %v92, %v94
    %v97 = vsub.f32 2.0, %v95
    %v98 = vsub.f32 2.0, %v96
    %v99 = vmul.f32 %v93, %v97
    %v100 = vmul.f32 %v94, %v98
    %vm101 = vcmp.ge.f32.partialorder %v59, 0.0
    %vm102 = vcmp.ge.f32.partialorder %v60, 0.0
    %v103 = vmul.f32 %v68, %v99
    %v104 = vmul.f32 %v70, %v100
    %v105 = vsel %vm101, %v99, %v103
    %v106 = vsel %vm102, %v100, %v104
    %vm107 = vcmp.lt.f32.partialorder %v59, -100.0
    %vm108 = vcmp.lt.f32.partialorder %v60, -100.0
    %v109 = vsub.f32 %v59, %v89
    %v110 = vsub.f32 %v60, %v90
    %v111 = vsub.f32 %v109, %v79
    %v112 = vsub.f32 %v110, %v88
    %v113 = vsel %vm107, -100.0, %v111
    %v114 = vsel %vm108, -100.0, %v112
    %vm115 = vcmp.gt.f32.partialorder %v59, 17.32868
    %vm116 = vcmp.gt.f32.partialorder %v60, 17.32868
    %v117 = vadd.f32 %v89, %v79
    %v118 = vadd.f32 %v90, %v88
    %v119 = vsub.f32 0.0, %v117
    %v120 = vsub.f32 0.0, %v118
    %v121 = vsel %vm115, -100.0, %v119
    %v122 = vsel %vm116, -100.0, %v120
    %v123 = vsub.f32 %v113, %v121
    %v124 = vsub.f32 %v114, %v122
    %v125 = vmul.f32 %v61, %v123
    %v126 = vmul.f32 %v62, %v124
    %v127 = vadd.f32 %v121, %v125
    %v128 = vadd.f32 %v122, %v126
    %v129 = vsub.f32 0.0, %v127
    %v130 = vsub.f32 0.0, %v128
    %v131 = vmul.f32 %v105, %v61
    %v132 = vmul.f32 %v106, %v62
    %v133 = vadd.f32 %v105, %v61
    %v134 = vadd.f32 %v106, %v62
    %v135 = vld [vmem:[#allocation7] sm:$0xff]
    %v136 = vadd.f32 %v131, %v132
    %v137 = vadd.f32 %v135, %v136
    %138 = vst [vmem:[#allocation7] sm:$0xff] %v137
    %s139 = scalar_lea.vmem [#allocation7], 8
    %v140 = vld [vmem:[%s139] sm:$0xff]
    %v141 = vadd.f32 %v133, %v134
    %v142 = vadd.f32 %v140, %v141
    %143 = vst [vmem:[%s139] sm:$0xff] %v142
    %s144 = scalar_lea.vmem [#allocation7], 16
    %v145 = vld [vmem:[%s144] sm:$0xff]
    %v146 = vadd.f32 %v129, %v130
    %v147 = vadd.f32 %v145, %v146
    %148 = vst [vmem:[%s144] sm:$0xff] %v147
    // Predicated region
    $region22: #{tpu_custom_call.1} parent=1 // pred_check
      _
    $region23: #{tpu_custom_call.1} parent=1 // pred_check_branch
      %150 = sbr.rel (0) target = $region25
    $region24: #{tpu_custom_call.1} parent=1 // pred_region
      %s152 = ssub.s32 384, 384
      %153 = vsyncadd [#allocation4], %s152
      %s154 = sshll.u32 [#allocation7], 4
      %s155 = int_to_ptr.vmem [resolvable:$true] %s154
      %160 = dma.vmem_to_hbm [thread:$0]  %s155, 384, %s2, [#allocation4], 128, 128, 8
    $region25: #{tpu_custom_call.1} parent=1 // pred_fallthru
      _
    // Predicated region
    $region26: #{tpu_custom_call.1} parent=1 // pred_check
      _
    $region27: #{tpu_custom_call.1} parent=1 // pred_check_branch
      %162 = sbr.rel (0) target = $region29
    $region28: #{tpu_custom_call.1} parent=1 // pred_region
      %163 = dma.done [#allocation4], 384
    $region29: #{tpu_custom_call.1} parent=1 // pred_fallthru
      _
    %164 = vsyncpa [#allocation3], 1
    %165 = vsyncpa [#allocation6], 1
    %166 = vsyncpa [#allocation4], 1

</llo_original>
